<compile_context>
chip_gen: v5e
topology: v5e:2x2
jax: 0.10.0
libtpu: 0.0.40
codegen_flags: <defaults>
</compile_context>

<pallas_src>
import functools

import jax
import jax.numpy as jnp
from jax.experimental import pallas as pl
from jax.experimental.pallas import tpu as pltpu

LRELU_SLOPE = 0.1
KERNEL_SIZE = 3
DILATIONS = (1, 3)


def _round_up(v, m):
    return (v + m - 1) // m * m


def _leaky_relu(v):
    # mul + max (2 VALU ops) instead of cmp + mul + select.
    return jnp.maximum(v, LRELU_SLOPE * v)


def _resblock2_kernel(x_ref, m_ref, *wb_o, kernel_size, dilations, halo):
    """One (batch, T-tile) grid step.

    x_ref : (W, Cp) bf16  halo'd window of x (channels-last), W = Tt + 2H
    m_ref : (W, 1)  f32   mask over the window; zero outside [0, T), which also
                          realizes the conv 'same' zero padding at sequence ends
    wb_o  : w0, b0, w1, b1, ..., o_ref
            w_j : (K*Cp, Cp) bf16 im2col weight;  b_j : (1, Cp) f32
    o_ref : (Tt, Cp)      output tile (rows [H, H+Tt) of the window)
    """
    o_ref = wb_o[-1]
    wb = wb_o[:-1]
    H = halo
    W, Cp = x_ref.shape
    Tt = o_ref.shape[0]

    mask = m_ref[...]                                    # (W, 1) f32
    cur = x_ref[...].astype(jnp.float32)                 # f32 residual carrier

    for j, dil in enumerate(dilations):
        # Elementwise stage in f32 (v5e-safe), then ONE cast of the (W, Cp)
        # activation to bf16 before the im2col taps are built.
        xt = _leaky_relu(cur) * mask                     # (W, Cp) f32, VPU
        xtb = xt.astype(jnp.bfloat16)
        zpad = jnp.zeros((dil, Cp), jnp.bfloat16)
        xp = jnp.concatenate([zpad, xtb, zpad], axis=0)  # (W + 2*dil, Cp) bf16
        # im2col: K shifted row-views, lane-concat -> one MXU matmul with a
        # K*Cp-deep contraction.  slab[w, k*Cp + c] = xt[w + (k-1)*dil, c]
        # ('same' padding, pad = dil for K=3).  Window-edge rows are never
        # consumed by valid outputs (halo H >= sum of pads).
        slab = jnp.concatenate(
            [xp[k * dil:k * dil + W] for k in range(kernel_size)], axis=1)
        y = jax.lax.dot_general(slab, wb[2 * j][...],
                                (((1,), (0,)), ((), ())),
                                preferred_element_type=jnp.float32)  # (W, Cp)
        # conv + bias + residual, accumulated in f32 over the full window.
        cur = y + cur + wb[2 * j + 1][...]

    o_ref[...] = (cur[H:H + Tt] * mask[H:H + Tt]).astype(o_ref.dtype)


@functools.partial(jax.jit, static_argnames=(
    "kernel_size", "dilations", "t_tile", "vmem_limit_bytes"))
def resblock2_forward(x, weights, biases, x_mask=None, *,
                      kernel_size=KERNEL_SIZE, dilations=DILATIONS,
                      t_tile=512, vmem_limit_bytes=48 * 1024 * 1024):
    """ResBlock2.forward.

    x:       (B, C, T)   PyTorch NCT layout
    weights: list of Conv1d weights, each (C_out, C_in, K) = (C, C, K)
             (weight_norm already folded into the plain weight)
    biases:  list of (C,)
    x_mask:  (B, 1, T) or None
    returns: (B, C, T)
    """
    assert len(weights) == len(biases) == len(dilations)
    B, C, T = x.shape
    K = kernel_size

    pads = [d * (K - 1) // 2 for d in dilations]
    H = max(8, _round_up(sum(pads), 8))        # halo rows per side, 8-aligned
    assert sum(pads) <= H
    Cp = _round_up(C, 128)                     # lane-dense channels
    Tt = max(H, min(_round_up(t_tile, 8), _round_up(T, 8)))
    NT = -(-T // Tt)
    Tr = NT * Tt
    W = Tt + 2 * H

    f32 = jnp.float32

    # ---- layout plumbing (XLA side) -----------------------------------------
    # One padded channels-last copy of x, streamed to the kernel in bf16 as
    # per-tile overlapping windows (B, NT, W, Cp).  No duplicated full-size
    # arrays, no in-kernel halo concatenation.
    x_tc = jnp.transpose(x, (0, 2, 1))                               # (B, T, C)
    x_pad = jnp.pad(x_tc, ((0, 0), (H, Tr - T + H), (0, Cp - C))
                    ).astype(jnp.bfloat16)                           # (B, Tr+2H, Cp)

    def _windows(a):
        # a: (B, Tr + 2H, L) -> (B, NT, W, L), window i = rows [i*Tt, i*Tt + W).
        L = a.shape[-1]
        center = a[:, H:H + Tr].reshape(B, NT, Tt, L)
        left = a[:, :Tr].reshape(B, NT, Tt, L)[:, :, :H]
        tail = jnp.pad(a[:, Tt + H:], ((0, 0), (0, Tt - H), (0, 0)))
        right = tail.reshape(B, NT, Tt, L)[:, :, :H]
        return jnp.concatenate([left, center, right], axis=2)

    x_win = _windows(x_pad)                                          # (B, NT, W, Cp) bf16

    # Window mask: zero outside [0, T) (this is what implements the conv
    # boundary zero-padding for the chained convs, also when x_mask is None).
    if x_mask is None:
        mask_t1 = jnp.ones((B, T, 1), f32)
    else:
        mask_t1 = jnp.transpose(x_mask, (0, 2, 1)).astype(f32)       # (B, T, 1)
    m_pad = jnp.pad(mask_t1, ((0, 0), (H, Tr - T + H), (0, 0)))
    m_win = _windows(m_pad)                                          # (B, NT, W, 1) f32

    # weights -> (K*Cp, Cp) bf16 im2col form; biases -> (1, Cp) f32 (VMEM-resident).
    w2d, b2d = [], []
    for w, b in zip(weights, biases):
        wp = jnp.pad(w, ((0, Cp - C), (0, Cp - C), (0, 0)))          # (Cp, Cp, K)
        w2d.append(jnp.transpose(wp, (2, 1, 0)).reshape(K * Cp, Cp)
                   .astype(jnp.bfloat16))
        b2d.append(jnp.pad(b, (0, Cp - C)).astype(f32).reshape(1, Cp))

    # ---- pallas_call --------------------------------------------------------
    x_spec = pl.BlockSpec((None, None, W, Cp), lambda b, i: (b, i, 0, 0))
    m_spec = pl.BlockSpec((None, None, W, 1), lambda b, i: (b, i, 0, 0))
    w_spec = pl.BlockSpec((K * Cp, Cp), lambda b, i: (0, 0))          # resident
    b_spec = pl.BlockSpec((1, Cp), lambda b, i: (0, 0))               # resident

    in_specs = [x_spec, m_spec]
    args = [x_win, m_win]
    for wj, bj in zip(w2d, b2d):
        in_specs += [w_spec, b_spec]
        args += [wj, bj]

    kernel = functools.partial(
        _resblock2_kernel, kernel_size=K, dilations=tuple(dilations), halo=H)

    out = pl.pallas_call(
        kernel,
        grid=(B, NT),
        in_specs=in_specs,
        out_specs=pl.BlockSpec((None, Tt, Cp), lambda b, i: (b, i, 0)),
        out_shape=jax.ShapeDtypeStruct((B, Tr, Cp), x.dtype),
        compiler_params=pltpu.CompilerParams(
            dimension_semantics=("parallel", "parallel"),
            vmem_limit_bytes=vmem_limit_bytes),
    )(*args)

    return jnp.transpose(out[:, :T, :C], (0, 2, 1))


def _reference_forward(x_nct, weights_oik, biases, dilations, mask_n1t=None,
                       kernel_size=KERNEL_SIZE):
    """Pure-JAX f32 reference mirroring the PyTorch module (NCT layout)."""
    x = x_nct
    for w, b, d in zip(weights_oik, biases, dilations):
        xt = jnp.where(x >= 0, x, LRELU_SLOPE * x)
        if mask_n1t is not None:
            xt = xt * mask_n1t
        pad = d * (kernel_size - 1) // 2
        y = jax.lax.conv_general_dilated(
            xt, w, window_strides=(1,), padding=[(pad, pad)],
            rhs_dilation=(d,), dimension_numbers=('NCH', 'OIH', 'NCH'))
        y = y + b[None, :, None]
        x = y + x
    if mask_n1t is not None:
        x = x * mask_n1t
    return x


if __name__ == "__main__":
    B, C, T = 2, 4, 40
    key = jax.random.PRNGKey(0)
    kx, kw1, kw2, kb1, kb2, km = jax.random.split(key, 6)

    # PyTorch layout: x (B, C, T), Conv1d weights (C_out, C_in, K).
    x = jax.random.normal(kx, (B, C, T), jnp.float32)
    # init_weights: normal(0, 0.01); weight_norm is identity at init.
    w1 = 0.01 * jax.random.normal(kw1, (C, C, KERNEL_SIZE), jnp.float32)
    w2 = 0.01 * jax.random.normal(kw2, (C, C, KERNEL_SIZE), jnp.float32)
    b1 = 0.01 * jax.random.normal(kb1, (C,), jnp.float32)
    b2 = 0.01 * jax.random.normal(kb2, (C,), jnp.float32)
    mask = (jax.random.uniform(km, (B, 1, T)) > 0.2).astype(jnp.float32)

    # t_tile=16 -> 3 T-tiles: exercises the overlapping windows across tiles.
    out = resblock2_forward(x, [w1, w2], [b1, b2], mask, t_tile=16)
    out = jax.block_until_ready(out)
    ref = _reference_forward(x, [w1, w2], [b1, b2], DILATIONS, mask)
    assert out.shape == (B, C, T)
    err = float(jnp.max(jnp.abs(out - ref)))
    # bf16 activation stream + bf16 matmul operands (f32 accumulation/residual).
    assert jnp.allclose(out, ref, atol=2e-2, rtol=2e-2), err

    # x_mask=None path, default (large) t_tile -> single tile.
    out2 = jax.block_until_ready(
        resblock2_forward(x, [w1, w2], [b1, b2], None))
    ref2 = _reference_forward(x, [w1, w2], [b1, b2], DILATIONS, None)
    err2 = float(jnp.max(jnp.abs(out2 - ref2)))
    assert jnp.allclose(out2, ref2, atol=2e-2, rtol=2e-2), err2

    print("KERNEL_OK")
</pallas_src>

<mosaic_0001>
module attributes {stable_mosaic.version = 11 : i64} {
  func.func @_resblock2_kernel(%arg0: i32, %arg1: i32, %arg2: memref<1x1x32x128xbf16, #tpu.memory_space<vmem>>, %arg3: memref<1x1x32x1xf32, #tpu.memory_space<vmem>>, %arg4: memref<384x128xbf16, #tpu.memory_space<vmem>>, %arg5: memref<1x128xf32, #tpu.memory_space<vmem>>, %arg6: memref<384x128xbf16, #tpu.memory_space<vmem>>, %arg7: memref<1x128xf32, #tpu.memory_space<vmem>>, %arg8: memref<1x16x128xf32, #tpu.memory_space<vmem>>) attributes {dimension_semantics = [#tpu.dimension_semantics<parallel>, #tpu.dimension_semantics<parallel>], iteration_bounds = array<i64: 2, 3>, scalar_prefetch = 0 : i64, scratch_operands = 0 : i64, tpu.core_type = #tpu.core_type<tc>, window_params = [{transform_indices = @transform_0, window_bounds = array<i64: 1, 1, 32, 128>}, {transform_indices = @transform_1, window_bounds = array<i64: 1, 1, 32, 1>}, {pipeline_mode = #tpu.pipeline_mode<synchronous>, transform_indices = @transform_2, window_bounds = array<i64: 384, 128>}, {pipeline_mode = #tpu.pipeline_mode<synchronous>, transform_indices = @transform_3, window_bounds = array<i64: 1, 128>}, {pipeline_mode = #tpu.pipeline_mode<synchronous>, transform_indices = @transform_4, window_bounds = array<i64: 384, 128>}, {pipeline_mode = #tpu.pipeline_mode<synchronous>, transform_indices = @transform_5, window_bounds = array<i64: 1, 128>}, {transform_indices = @transform_6, window_bounds = array<i64: 1, 16, 128>}]} {
    %c0 = arith.constant 0 : index
    %c0_0 = arith.constant 0 : index
    %c0_1 = arith.constant 0 : index
    %c0_2 = arith.constant 0 : index
    %0 = vector.load %arg3[%c0, %c0_0, %c0_1, %c0_2] : memref<1x1x32x1xf32, #tpu.memory_space<vmem>>, vector<1x1x32x1xf32>
    %1 = vector.shape_cast %0 : vector<1x1x32x1xf32> to vector<32x1xf32>
    %c0_3 = arith.constant 0 : index
    %c0_4 = arith.constant 0 : index
    %c0_5 = arith.constant 0 : index
    %c0_6 = arith.constant 0 : index
    %2 = vector.load %arg2[%c0_3, %c0_4, %c0_5, %c0_6] : memref<1x1x32x128xbf16, #tpu.memory_space<vmem>>, vector<1x1x32x128xbf16>
    %3 = vector.shape_cast %2 : vector<1x1x32x128xbf16> to vector<32x128xbf16>
    %4 = arith.extf %3 : vector<32x128xbf16> to vector<32x128xf32>
    %cst = arith.constant 1.000000e-01 : f32
    %5 = vector.broadcast %cst : f32 to vector<32x128xf32>
    %6 = arith.mulf %5, %4 : vector<32x128xf32>
    %7 = arith.maximumf %4, %6 : vector<32x128xf32>
    %8 = vector.broadcast %1 : vector<32x1xf32> to vector<32x128xf32>
    %9 = arith.mulf %7, %8 : vector<32x128xf32>
    %10 = arith.truncf %9 : vector<32x128xf32> to vector<32x128xbf16>
    %cst_7 = arith.constant 0.000000e+00 : bf16
    %11 = vector.broadcast %cst_7 : bf16 to vector<1x128xbf16>
    %12 = tpu.concatenate %11, %10, %11 in 0 : vector<1x128xbf16>, vector<32x128xbf16>, vector<1x128xbf16> -> vector<34x128xbf16>
    %13 = vector.extract_strided_slice %12 {offsets = [0, 0], sizes = [32, 128], strides = [1, 1]} : vector<34x128xbf16> to vector<32x128xbf16>
    %14 = vector.extract_strided_slice %12 {offsets = [1, 0], sizes = [32, 128], strides = [1, 1]} : vector<34x128xbf16> to vector<32x128xbf16>
    %15 = vector.extract_strided_slice %12 {offsets = [2, 0], sizes = [32, 128], strides = [1, 1]} : vector<34x128xbf16> to vector<32x128xbf16>
    %16 = tpu.concatenate %13, %14, %15 in 1 : vector<32x128xbf16>, vector<32x128xbf16>, vector<32x128xbf16> -> vector<32x384xbf16>
    %c0_8 = arith.constant 0 : index
    %c0_9 = arith.constant 0 : index
    %17 = vector.load %arg4[%c0_8, %c0_9] : memref<384x128xbf16, #tpu.memory_space<vmem>>, vector<384x128xbf16>
    %cst_10 = arith.constant dense<0.000000e+00> : vector<32x128xf32>
    %18 = tpu.matmul %16, %17, %cst_10 {dimension_numbers = #tpu.dot_dimension_numbers<[1], [0], [0], [1], [0, 0, 1, 1], [], []>} : vector<32x384xbf16>, vector<384x128xbf16>, vector<32x128xf32> -> vector<32x128xf32>
    %19 = arith.addf %18, %4 : vector<32x128xf32>
    %c0_11 = arith.constant 0 : index
    %c0_12 = arith.constant 0 : index
    %20 = vector.load %arg5[%c0_11, %c0_12] : memref<1x128xf32, #tpu.memory_space<vmem>>, vector<1x128xf32>
    %21 = vector.broadcast %20 : vector<1x128xf32> to vector<32x128xf32>
    %22 = arith.addf %19, %21 : vector<32x128xf32>
    %cst_13 = arith.constant 1.000000e-01 : f32
    %23 = vector.broadcast %cst_13 : f32 to vector<32x128xf32>
    %24 = arith.mulf %23, %22 : vector<32x128xf32>
    %25 = arith.maximumf %22, %24 : vector<32x128xf32>
    %26 = vector.broadcast %1 : vector<32x1xf32> to vector<32x128xf32>
    %27 = arith.mulf %25, %26 : vector<32x128xf32>
    %28 = arith.truncf %27 : vector<32x128xf32> to vector<32x128xbf16>
    %cst_14 = arith.constant 0.000000e+00 : bf16
    %29 = vector.broadcast %cst_14 : bf16 to vector<3x128xbf16>
    %30 = tpu.concatenate %29, %28, %29 in 0 : vector<3x128xbf16>, vector<32x128xbf16>, vector<3x128xbf16> -> vector<38x128xbf16>
    %31 = vector.extract_strided_slice %30 {offsets = [0, 0], sizes = [32, 128], strides = [1, 1]} : vector<38x128xbf16> to vector<32x128xbf16>
    %32 = vector.extract_strided_slice %30 {offsets = [3, 0], sizes = [32, 128], strides = [1, 1]} : vector<38x128xbf16> to vector<32x128xbf16>
    %33 = vector.extract_strided_slice %30 {offsets = [6, 0], sizes = [32, 128], strides = [1, 1]} : vector<38x128xbf16> to vector<32x128xbf16>
    %34 = tpu.concatenate %31, %32, %33 in 1 : vector<32x128xbf16>, vector<32x128xbf16>, vector<32x128xbf16> -> vector<32x384xbf16>
    %c0_15 = arith.constant 0 : index
    %c0_16 = arith.constant 0 : index
    %35 = vector.load %arg6[%c0_15, %c0_16] : memref<384x128xbf16, #tpu.memory_space<vmem>>, vector<384x128xbf16>
    %cst_17 = arith.constant dense<0.000000e+00> : vector<32x128xf32>
    %36 = tpu.matmul %34, %35, %cst_17 {dimension_numbers = #tpu.dot_dimension_numbers<[1], [0], [0], [1], [0, 0, 1, 1], [], []>} : vector<32x384xbf16>, vector<384x128xbf16>, vector<32x128xf32> -> vector<32x128xf32>
    %37 = arith.addf %36, %22 : vector<32x128xf32>
    %c0_18 = arith.constant 0 : index
    %c0_19 = arith.constant 0 : index
    %38 = vector.load %arg7[%c0_18, %c0_19] : memref<1x128xf32, #tpu.memory_space<vmem>>, vector<1x128xf32>
    %39 = vector.broadcast %38 : vector<1x128xf32> to vector<32x128xf32>
    %40 = arith.addf %37, %39 : vector<32x128xf32>
    %41 = vector.extract_strided_slice %40 {offsets = [8, 0], sizes = [16, 128], strides = [1, 1]} : vector<32x128xf32> to vector<16x128xf32>
    %42 = vector.extract_strided_slice %1 {offsets = [8, 0], sizes = [16, 1], strides = [1, 1]} : vector<32x1xf32> to vector<16x1xf32>
    %43 = vector.broadcast %42 : vector<16x1xf32> to vector<16x128xf32>
    %44 = arith.mulf %41, %43 : vector<16x128xf32>
    %c0_20 = arith.constant 0 : index
    %c0_21 = arith.constant 0 : index
    %c0_22 = arith.constant 0 : index
    %45 = vector.load %arg8[%c0_20, %c0_21, %c0_22] : memref<1x16x128xf32, #tpu.memory_space<vmem>>, vector<1x16x128xf32>
    %46 = vector.shape_cast %45 : vector<1x16x128xf32> to vector<16x128xf32>
    %47 = vector.shape_cast %44 : vector<16x128xf32> to vector<1x16x128xf32>
    tpu.vector_store %arg8[%c0_20, %c0_21, %c0_22], %47 {strides = array<i32>} : memref<1x16x128xf32, #tpu.memory_space<vmem>>, vector<1x16x128xf32>,
    return
  }
  func.func @transform_0(%arg0: i32, %arg1: i32) -> (i32, i32, i32, i32) {
    %c0_i32 = arith.constant 0 : i32
    %c0_i32_0 = arith.constant 0 : i32
    %c0_i32_1 = arith.constant 0 : i32
    return %arg0, %arg1, %c0_i32, %c0_i32_0 : i32, i32, i32, i32
  }
  func.func @transform_1(%arg0: i32, %arg1: i32) -> (i32, i32, i32, i32) {
    %c0_i32 = arith.constant 0 : i32
    %c0_i32_0 = arith.constant 0 : i32
    %c0_i32_1 = arith.constant 0 : i32
    return %arg0, %arg1, %c0_i32, %c0_i32_0 : i32, i32, i32, i32
  }
  func.func @transform_2(%arg0: i32, %arg1: i32) -> (i32, i32) {
    %c0_i32 = arith.constant 0 : i32
    %c0_i32_0 = arith.constant 0 : i32
    %c0_i32_1 = arith.constant 0 : i32
    return %c0_i32, %c0_i32_0 : i32, i32
  }
  func.func @transform_3(%arg0: i32, %arg1: i32) -> (i32, i32) {
    %c0_i32 = arith.constant 0 : i32
    %c0_i32_0 = arith.constant 0 : i32
    %c0_i32_1 = arith.constant 0 : i32
    return %c0_i32, %c0_i32_0 : i32, i32
  }
  func.func @transform_4(%arg0: i32, %arg1: i32) -> (i32, i32) {
    %c0_i32 = arith.constant 0 : i32
    %c0_i32_0 = arith.constant 0 : i32
    %c0_i32_1 = arith.constant 0 : i32
    return %c0_i32, %c0_i32_0 : i32, i32
  }
  func.func @transform_5(%arg0: i32, %arg1: i32) -> (i32, i32) {
    %c0_i32 = arith.constant 0 : i32
    %c0_i32_0 = arith.constant 0 : i32
    %c0_i32_1 = arith.constant 0 : i32
    return %c0_i32, %c0_i32_0 : i32, i32
  }
  func.func @transform_6(%arg0: i32, %arg1: i32) -> (i32, i32, i32) {
    %c0_i32 = arith.constant 0 : i32
    %c0_i32_0 = arith.constant 0 : i32
    return %arg0, %arg1, %c0_i32 : i32, i32, i32
  }
}

</mosaic_0001>

<llo_original>
// kernel: resblock2_forward.1
$region0: #{resblock2_forward.1}
  #allocation0 [shape = 'u32[]', space=smem, size = 0x4, offset = 0x4, fixed_abs, tag = 'smem constant byte address 0x4 - core index']
  #allocation1 [shape = 'u32[72,128]{1,0:T(1,128)}', space=vmem, size = 0x9000, scoped, tag = 'internal scratch']
  %s0 = inlined_call_operand.vmem [shape: bf16[2,3,32,128], index: 0, kind: input, shape index: {}]
  %s1 = inlined_call_operand.vmem [shape: f32[2,3,32,1], index: 1, kind: input, shape index: {}]
  %s2 = inlined_call_operand.vmem [shape: bf16[384,128], index: 2, kind: input, shape index: {}]
  %s3 = inlined_call_operand.vmem [shape: f32[1,128], index: 3, kind: input, shape index: {}]
  %s4 = inlined_call_operand.vmem [shape: bf16[384,128], index: 4, kind: input, shape index: {}]
  %s5 = inlined_call_operand.vmem [shape: f32[1,128], index: 5, kind: input, shape index: {}]
  %s6 = inlined_call_operand.vmem [shape: f32[2,48,128], index: 6, kind: output, shape index: {}]
  %s7 = sld [smem:[#allocation0]]
  $region57: #{resblock2_forward.1} parent=0
    _
  %s9 = ssub.s32 1, %s7
  %s10 = scalar_select 0, %s9, %s7
  loop: start=0, step=1, limit=8
  $region2: #{resblock2_forward.1} parent=0 // loop_pre_header
    _
  $region3: #{resblock2_forward.1} parent=0 // loop_header
    %s12 = sphi 0, %s16
    %p13 = scmp.ge.s32.totalorder %s12, 8
    %s19 = sphi 0, %s31
    %s20 = sphi 0, %s27
    %s21 = sphi 0, %s19
    %s22 = sphi 0, %s20
    %s23 = sphi 0, %s21
    %s24 = sphi 0, %s22
    %s36 = sphi 0, %s38
    %s39 = sphi 0, %s36
    %s40 = sphi 0, %s39
    %s56 = sphi 0, %s40
    %s64 = sphi 0, %s66
    %s67 = sphi 0, %s64
    %s68 = sphi 0, %s67
    %s84 = sphi 0, %s68
    %s88 = sphi 0, %s88
    %s90 = sphi 0, %s88
    %s91 = sphi 0, %s90
    %s105 = sphi 0, %s91
    %s109 = sphi 0, %s109
    %s111 = sphi 0, %s109
    %s112 = sphi 0, %s111
    %s126 = sphi 0, %s112
    %s130 = sphi 0, %s130
    %s132 = sphi 0, %s130
    %s133 = sphi 0, %s132
    %s147 = sphi 0, %s133
    %s151 = sphi 0, %s151
    %s153 = sphi 0, %s151
    %s154 = sphi 0, %s153
    %s168 = sphi 0, %s154
    %s176 = sphi 0, %s178
    %s179 = sphi 0, %s176
    %s180 = sphi 0, %s179
    %s196 = sphi 0, %s180
  $region4: #{resblock2_forward.1} parent=0 // loop_header_branch
    %15 = sbr.rel (%p13) target = $region8
  $region5: #{resblock2_forward.1} parent=0 // loop_body
    %s17 = ssub.s32 %s12, 1
    %s18 = ssub.s32 %s12, 2
    %s25 = sadd.s32 1, %s20
    %p26 = scmp.ge.s32.totalorder %s25, 3
    %s27 = scalar_select %p26, 0, %s25
    %s28 = sadd.s32 1, %s19
    %s29 = scalar_select %p26, %s28, %s19
    %p30 = scmp.ge.s32.totalorder %s29, 2
    %s31 = scalar_select %p30, 0, %s29
    %s32 = ssub.s32 %s19, %s31
    %s33 = ssub.s32 %s20, %s27
    %s34 = sor.u32 %s32, %s33
    %p35 = scmp.eq.s32.totalorder %s34, 0
    %s37 = sadd.s32 %s36, 1
    %s38 = scalar_select %p35, %s36, %s37
    %p41 = pneg %p35
    %p42 = scmp.eq.s32.totalorder %s12, 5
    %p43 = por %p41, %p42
    %p44 = scmp.ne.s32.totalorder %s36, %s39
    %p45 = scmp.eq.s32.totalorder %s12, 0
    %p46 = por %p44, %p45
    %p47 = scmp.ne.s32.totalorder %s36, %s39
    %p48 = scmp.eq.s32.totalorder %s17, 5
    %p49 = por %p47, %p48
    %p50 = scmp.ne.s32.totalorder %s39, %s40
    %p51 = scmp.eq.s32.totalorder %s17, 0
    %p52 = por %p50, %p51
    %p53 = scmp.ne.s32.totalorder %s39, %s40
    %p54 = scmp.eq.s32.totalorder %s18, 5
    %p55 = por %p53, %p54
    %p57 = scmp.ne.s32.totalorder %s40, %s56
    %p58 = scmp.eq.s32.totalorder %s18, 0
    %p59 = por %p57, %p58
    %s60 = ssub.s32 %s19, %s31
    %s61 = ssub.s32 %s20, %s27
    %s62 = sor.u32 %s60, %s61
    %p63 = scmp.eq.s32.totalorder %s62, 0
    %s65 = sadd.s32 %s64, 1
    %s66 = scalar_select %p63, %s64, %s65
    %p69 = pneg %p63
    %p70 = scmp.eq.s32.totalorder %s12, 5
    %p71 = por %p69, %p70
    %p72 = scmp.ne.s32.totalorder %s64, %s67
    %p73 = scmp.eq.s32.totalorder %s12, 0
    %p74 = por %p72, %p73
    %p75 = scmp.ne.s32.totalorder %s64, %s67
    %p76 = scmp.eq.s32.totalorder %s17, 5
    %p77 = por %p75, %p76
    %p78 = scmp.ne.s32.totalorder %s67, %s68
    %p79 = scmp.eq.s32.totalorder %s17, 0
    %p80 = por %p78, %p79
    %p81 = scmp.ne.s32.totalorder %s67, %s68
    %p82 = scmp.eq.s32.totalorder %s18, 5
    %p83 = por %p81, %p82
    %p85 = scmp.ne.s32.totalorder %s68, %s84
    %p86 = scmp.eq.s32.totalorder %s18, 0
    %p87 = por %p85, %p86
    %s89 = sadd.s32 %s88, 1
    %p92 = scmp.eq.s32.totalorder %s12, 5
    %p93 = scmp.ne.s32.totalorder %s88, %s90
    %p94 = scmp.eq.s32.totalorder %s12, 0
    %p95 = por %p93, %p94
    %p96 = scmp.ne.s32.totalorder %s88, %s90
    %p97 = scmp.eq.s32.totalorder %s17, 5
    %p98 = por %p96, %p97
    %p99 = scmp.ne.s32.totalorder %s90, %s91
    %p100 = scmp.eq.s32.totalorder %s17, 0
    %p101 = por %p99, %p100
    %p102 = scmp.ne.s32.totalorder %s90, %s91
    %p103 = scmp.eq.s32.totalorder %s18, 5
    %p104 = por %p102, %p103
    %p106 = scmp.ne.s32.totalorder %s91, %s105
    %p107 = scmp.eq.s32.totalorder %s18, 0
    %p108 = por %p106, %p107
    %s110 = sadd.s32 %s109, 1
    %p113 = scmp.eq.s32.totalorder %s12, 5
    %p114 = scmp.ne.s32.totalorder %s109, %s111
    %p115 = scmp.eq.s32.totalorder %s12, 0
    %p116 = por %p114, %p115
    %p117 = scmp.ne.s32.totalorder %s109, %s111
    %p118 = scmp.eq.s32.totalorder %s17, 5
    %p119 = por %p117, %p118
    %p120 = scmp.ne.s32.totalorder %s111, %s112
    %p121 = scmp.eq.s32.totalorder %s17, 0
    %p122 = por %p120, %p121
    %p123 = scmp.ne.s32.totalorder %s111, %s112
    %p124 = scmp.eq.s32.totalorder %s18, 5
    %p125 = por %p123, %p124
    %p127 = scmp.ne.s32.totalorder %s112, %s126
    %p128 = scmp.eq.s32.totalorder %s18, 0
    %p129 = por %p127, %p128
    %s131 = sadd.s32 %s130, 1
    %p134 = scmp.eq.s32.totalorder %s12, 5
    %p135 = scmp.ne.s32.totalorder %s130, %s132
    %p136 = scmp.eq.s32.totalorder %s12, 0
    %p137 = por %p135, %p136
    %p138 = scmp.ne.s32.totalorder %s130, %s132
    %p139 = scmp.eq.s32.totalorder %s17, 5
    %p140 = por %p138, %p139
    %p141 = scmp.ne.s32.totalorder %s132, %s133
    %p142 = scmp.eq.s32.totalorder %s17, 0
    %p143 = por %p141, %p142
    %p144 = scmp.ne.s32.totalorder %s132, %s133
    %p145 = scmp.eq.s32.totalorder %s18, 5
    %p146 = por %p144, %p145
    %p148 = scmp.ne.s32.totalorder %s133, %s147
    %p149 = scmp.eq.s32.totalorder %s18, 0
    %p150 = por %p148, %p149
    %s152 = sadd.s32 %s151, 1
    %p155 = scmp.eq.s32.totalorder %s12, 5
    %p156 = scmp.ne.s32.totalorder %s151, %s153
    %p157 = scmp.eq.s32.totalorder %s12, 0
    %p158 = por %p156, %p157
    %p159 = scmp.ne.s32.totalorder %s151, %s153
    %p160 = scmp.eq.s32.totalorder %s17, 5
    %p161 = por %p159, %p160
    %p162 = scmp.ne.s32.totalorder %s153, %s154
    %p163 = scmp.eq.s32.totalorder %s17, 0
    %p164 = por %p162, %p163
    %p165 = scmp.ne.s32.totalorder %s153, %s154
    %p166 = scmp.eq.s32.totalorder %s18, 5
    %p167 = por %p165, %p166
    %p169 = scmp.ne.s32.totalorder %s154, %s168
    %p170 = scmp.eq.s32.totalorder %s18, 0
    %p171 = por %p169, %p170
    %s172 = ssub.s32 %s19, %s31
    %s173 = ssub.s32 %s20, %s27
    %s174 = sor.u32 %s172, %s173
    %p175 = scmp.eq.s32.totalorder %s174, 0
    %s177 = sadd.s32 %s176, 1
    %s178 = scalar_select %p175, %s176, %s177
    %p181 = pneg %p175
    %p182 = scmp.eq.s32.totalorder %s12, 5
    %p183 = por %p181, %p182
    %p184 = scmp.ne.s32.totalorder %s176, %s179
    %p185 = scmp.eq.s32.totalorder %s12, 0
    %p186 = por %p184, %p185
    %p187 = scmp.ne.s32.totalorder %s176, %s179
    %p188 = scmp.eq.s32.totalorder %s17, 5
    %p189 = por %p187, %p188
    %p190 = scmp.ne.s32.totalorder %s179, %s180
    %p191 = scmp.eq.s32.totalorder %s17, 0
    %p192 = por %p190, %p191
    %p193 = scmp.ne.s32.totalorder %s179, %s180
    %p194 = scmp.eq.s32.totalorder %s18, 5
    %p195 = por %p193, %p194
    %p197 = scmp.ne.s32.totalorder %s180, %s196
    %p198 = scmp.eq.s32.totalorder %s18, 0
    %p199 = por %p197, %p198
    %p200 = scmp.le.s32.totalorder 1, %s12
    %p201 = scmp.lt.s32.totalorder %s12, 7
    %p202 = pnand %p200, %p201
    %p203 = pneg %p202
    // Predicated region
    $region9: #{resblock2_forward.1} parent=5 // pred_check
      _
    $region10: #{resblock2_forward.1} parent=5 // pred_check_branch
      %205 = sbr.rel (%p202) target = $region12
    $region11: #{resblock2_forward.1} parent=5 // pred_region
      %s206 = ssub.s32 %s12, 1
      // Predicated region
      $region13: #{resblock2_forward.1} parent=11 // pred_check
        %p207 = pneg %p101
      $region14: #{resblock2_forward.1} parent=11 // pred_check_branch
        %209 = sbr.rel (%p207) target = $region16
      $region15: #{resblock2_forward.1} parent=11 // pred_region
        _
      $region16: #{resblock2_forward.1} parent=11 // pred_fallthru
        _
      // Predicated region
      $region17: #{resblock2_forward.1} parent=11 // pred_check
        %p210 = pneg %p122
      $region18: #{resblock2_forward.1} parent=11 // pred_check_branch
        %212 = sbr.rel (%p210) target = $region20
      $region19: #{resblock2_forward.1} parent=11 // pred_region
        _
      $region20: #{resblock2_forward.1} parent=11 // pred_fallthru
        _
      // Predicated region
      $region21: #{resblock2_forward.1} parent=11 // pred_check
        %p213 = pneg %p143
      $region22: #{resblock2_forward.1} parent=11 // pred_check_branch
        %215 = sbr.rel (%p213) target = $region24
      $region23: #{resblock2_forward.1} parent=11 // pred_region
        _
      $region24: #{resblock2_forward.1} parent=11 // pred_fallthru
        _
      // Predicated region
      $region25: #{resblock2_forward.1} parent=11 // pred_check
        %p216 = pneg %p164
      $region26: #{resblock2_forward.1} parent=11 // pred_check_branch
        %218 = sbr.rel (%p216) target = $region28
      $region27: #{resblock2_forward.1} parent=11 // pred_region
        _
      $region28: #{resblock2_forward.1} parent=11 // pred_fallthru
        _
    $region12: #{resblock2_forward.1} parent=5 // pred_fallthru
      _
    %p219 = scmp.lt.s32.totalorder %s12, 6
    // Predicated region
    $region29: #{resblock2_forward.1} parent=5 // pred_check
      %p220 = pneg %p219
    $region30: #{resblock2_forward.1} parent=5 // pred_check_branch
      %222 = sbr.rel (%p220) target = $region32
    $region31: #{resblock2_forward.1} parent=5 // pred_region
      // Predicated region
      $region33: #{resblock2_forward.1} parent=31 // pred_check
        %p223 = pneg %p46
      $region34: #{resblock2_forward.1} parent=31 // pred_check_branch
        %225 = sbr.rel (%p223) target = $region36
      $region35: #{resblock2_forward.1} parent=31 // pred_region
        %p226 = scmp.lt.s32.totalorder %s19, 1
        %s227 = scalar_select %p226, %s19, 1
        %p228 = scmp.lt.s32.totalorder %s20, 2
        %s229 = scalar_select %p228, %s20, 2
        %s230 = smul.addr %s229, 4
        %s231 = smul.addr %s227, 12
        %s232 = sadd.s32 %s230, %s231
        %s233 = smul.addr %s232, 4
        %s234 = scalar_lea.vmem %s0, %s233
      $region36: #{resblock2_forward.1} parent=31 // pred_fallthru
        _
      // Predicated region
      $region37: #{resblock2_forward.1} parent=31 // pred_check
        %p235 = pneg %p74
      $region38: #{resblock2_forward.1} parent=31 // pred_check_branch
        %237 = sbr.rel (%p235) target = $region40
      $region39: #{resblock2_forward.1} parent=31 // pred_region
        %p238 = scmp.lt.s32.totalorder %s19, 1
        %s239 = scalar_select %p238, %s19, 1
        %p240 = scmp.lt.s32.totalorder %s20, 2
        %s241 = scalar_select %p240, %s20, 2
        %s242 = smul.addr %s241, 4
        %s243 = smul.addr %s239, 12
        %s244 = sadd.s32 %s242, %s243
        %s245 = smul.addr %s244, 8
        %s246 = scalar_lea.vmem %s1, %s245
      $region40: #{resblock2_forward.1} parent=31 // pred_fallthru
        _
    $region32: #{resblock2_forward.1} parent=5 // pred_fallthru
      _
    %p247 = scmp.le.s32.totalorder 1, %s12
    %p248 = scmp.lt.s32.totalorder %s12, 7
    %p249 = pnand %p247, %p248
    %p250 = pneg %p249
    // Predicated region
    $region41: #{resblock2_forward.1} parent=5 // pred_check
      _
    $region42: #{resblock2_forward.1} parent=5 // pred_check_branch
      %252 = sbr.rel (%p249) target = $region44
    $region43: #{resblock2_forward.1} parent=5 // pred_region
      %s253 = ssub.s32 %s12, 1
      %p254 = scmp.lt.s32.totalorder %s21, 1
      %s255 = scalar_select %p254, %s21, 1
      %p256 = scmp.lt.s32.totalorder %s22, 2
      %s257 = scalar_select %p256, %s22, 2
      %s258 = smul.addr %s257, 4
      %s259 = smul.addr %s255, 12
      %s260 = sadd.s32 %s258, %s259
      %s261 = smul.addr %s260, 4
      %s262 = scalar_lea.vmem %s0, %s261
      %p263 = pneg %p52
      %p264 = pneg %p49
      %p265 = scmp.lt.s32.totalorder %s21, 1
      %s266 = scalar_select %p265, %s21, 1
      %p267 = scmp.lt.s32.totalorder %s22, 2
      %s268 = scalar_select %p267, %s22, 2
      %s269 = smul.addr %s268, 4
      %s270 = smul.addr %s266, 12
      %s271 = sadd.s32 %s269, %s270
      %s272 = smul.addr %s271, 8
      %s273 = scalar_lea.vmem %s1, %s272
      %p274 = pneg %p80
      %p275 = pneg %p77
      %p276 = pneg %p101
      %p277 = pneg %p98
      %p278 = pneg %p122
      %p279 = pneg %p119
      %p280 = pneg %p143
      %p281 = pneg %p140
      %p282 = pneg %p164
      %p283 = pneg %p161
      %p284 = pneg %p192
      %p285 = pneg %p189
      %s286 = smul.u32 2, %s22
      %p287 = scmp.lt.s32.totalorder %s21, 1
      %s288 = scalar_select %p287, %s21, 1
      %p289 = scmp.lt.s32.totalorder %s286, 5
      %s290 = scalar_select %p289, %s286, 5
      %s291 = smul.addr %s288, 6
      %s292 = sadd.s32 %s290, %s291
      %s293 = smul.addr %s292, 8
      %s294 = scalar_lea.vmem %s6, %s293
      %p295 = scmp.lt.s32.totalorder %s21, 1
      %s296 = scalar_select %p295, %s21, 1
      %p297 = scmp.lt.s32.totalorder %s22, 2
      %s298 = scalar_select %p297, %s22, 2
      %s299 = smul.addr %s298, 4
      %s300 = smul.addr %s296, 12
      %s301 = sadd.s32 %s299, %s300
      %s302 = smul.addr %s301, 4
      %s303 = scalar_lea.vmem %s0, %s302
      %p304 = scmp.lt.s32.totalorder %s21, 1
      %s305 = scalar_select %p304, %s21, 1
      %p306 = scmp.lt.s32.totalorder %s22, 2
      %s307 = scalar_select %p306, %s22, 2
      %s308 = smul.addr %s307, 4
      %s309 = smul.addr %s305, 12
      %s310 = sadd.s32 %s308, %s309
      %s311 = smul.addr %s310, 8
      %s312 = scalar_lea.vmem %s1, %s311
      %s313 = smul.u32 2, %s22
      %p314 = scmp.lt.s32.totalorder %s21, 1
      %s315 = scalar_select %p314, %s21, 1
      %p316 = scmp.lt.s32.totalorder %s313, 5
      %s317 = scalar_select %p316, %s313, 5
      %s318 = smul.addr %s315, 6
      %s319 = sadd.s32 %s317, %s318
      %s320 = smul.addr %s319, 8
      %s321 = scalar_lea.vmem %s6, %s320
      %s322 = smul.u32 2, %s22
      %v324 = vld [vmem:[%s312] sm:$0xff]
      %v325 = vld [vmem:[%s312 + $0x8] sm:$0xff]
      %v326 = vld [vmem:[%s312 + $0x10] sm:$0xff]
      %v327 = vld [vmem:[%s312 + $0x18] sm:$0xff]
      %v328 = vld [vmem:[%s303] sm:$0xf]
      %v329 = vld [vmem:[%s303 + $0x4] sm:$0xf]
      %v330 = vld [vmem:[%s303 + $0x8] sm:$0xf]
      %v331 = vld [vmem:[%s303 + $0xc] sm:$0xf]
      %v332 = vunpack.c.l.bf16 %v328
      %v333 = vunpack.c.l.bf16 %v329
      %v334 = vunpack.c.l.bf16 %v330
      %v335 = vunpack.c.l.bf16 %v331
      %v336 = vmul.f32 %v332, 0.1
      %v337 = vmul.f32 %v333, 0.1
      %v338 = vmul.f32 %v334, 0.1
      %v339 = vmul.f32 %v335, 0.1
      %v340 = vmax.f32 %v332, %v336
      %v341 = vmax.f32 %v333, %v337
      %v342 = vmax.f32 %v334, %v338
      %v343 = vmax.f32 %v335, %v339
      %345 = vset.pattern.permute.xlu0 0
      %346 = vperm.xlu0 %345, %v324
      %v347 = vpop.permute.xlu0 %346
      %350 = vset.pattern.permute.xlu0 0
      %351 = vperm.xlu0 %350, %v325
      %v352 = vpop.permute.xlu0 %351
      %355 = vset.pattern.permute.xlu0 0
      %356 = vperm.xlu0 %355, %v326
      %v357 = vpop.permute.xlu0 %356
      %360 = vset.pattern.permute.xlu0 0
      %361 = vperm.xlu0 %360, %v327
      %v362 = vpop.permute.xlu0 %361
      %v364 = vmul.f32 %v340, %v347
      %v365 = vmul.f32 %v341, %v352
      %v366 = vmul.f32 %v342, %v357
      %v367 = vmul.f32 %v343, %v362
      %v368 = vpack.c.bf16 %v364, %v364
      %v369 = vpack.c.bf16 %v365, %v365
      %v370 = vpack.c.bf16 %v366, %v366
      %v371 = vpack.c.bf16 %v367, %v367
      %v376 = vunpack.c.l.b16 %v368
      %v377 = vunpack.c.l.b16 %v369
      %v378 = vunpack.c.l.b16 %v370
      %v379 = vunpack.c.l.b16 %v371
      %v380 = vpack.c.b16 %v377, %v376
      %v381 = vpack.c.b16 %v379, %v378
      %vm382 = vsmask.f32 256
      %v384 = vshrl.u32 %v380, 16
      %v386 = vrot.slane %v384, 7
      %v387 = vshll.u32 %v380, 16
      %v389 = vor.u32 %v386, %v387
      %v391 = vshrl.u32 %v381, 16
      %v393 = vrot.slane %v391, 7
      %v394 = vshll.u32 %v381, 16
      %v396 = vor.u32 %v393, %v394
      %v397 = vsel %vm382, %v386, %v396
      %vm401 = vcmask 1040384
      %vm402 = vmand %vm401, %vm382
      %v403 = vsel %vm402, 0, %v389
      %v404 = vsel %vm402, %v393, 0
      %vm405 = vsmask.f32 7424
      %v407 = vshrl.u32 %v403, 16
      %v409 = vshll.u32 %v403, 16
      %v411 = vrot.slane %v409, 1
      %v412 = vor.u32 %v407, %v411
      %v414 = vshll.u32 %v397, 16
      %v416 = vrot.slane %v414, 1
      %v417 = vsel %vm405, %v412, %v416
      %v418 = vshrl.u32 %v397, 16
      %v420 = vor.u32 %v418, %v416
      %v422 = vshll.u32 %v404, 16
      %v424 = vrot.slane %v422, 1
      %v425 = vsel %vm405, %v420, %v424
      %vm430 = vcmask 1046528
      %v431 = vrot.slane %v403, 1
      %v432 = vrot.slane %v397, 1
      %v433 = vsel %vm430, %v431, %v432
      %v434 = vrot.slane %v404, 1
      %v435 = vsel %vm430, %v432, %v434
      %v438 = vld [vmem:[%s2] sm:$0xf]
      %v439 = vld [vmem:[%s2 + $0x4] sm:$0xf]
      %v440 = vld [vmem:[%s2 + $0x8] sm:$0xf]
      %v441 = vld [vmem:[%s2 + $0xc] sm:$0xf]
      %v442 = vld [vmem:[%s2 + $0x10] sm:$0xf]
      %v443 = vld [vmem:[%s2 + $0x14] sm:$0xf]
      %v444 = vld [vmem:[%s2 + $0x18] sm:$0xf]
      %v445 = vld [vmem:[%s2 + $0x1c] sm:$0xf]
      %v446 = vld [vmem:[%s2 + $0x20] sm:$0xf]
      %v447 = vld [vmem:[%s2 + $0x24] sm:$0xf]
      %v448 = vld [vmem:[%s2 + $0x28] sm:$0xf]
      %v449 = vld [vmem:[%s2 + $0x2c] sm:$0xf]
      %v450 = vld [vmem:[%s2 + $0x30] sm:$0xf]
      %v451 = vld [vmem:[%s2 + $0x34] sm:$0xf]
      %v452 = vld [vmem:[%s2 + $0x38] sm:$0xf]
      %v453 = vld [vmem:[%s2 + $0x3c] sm:$0xf]
      %v454 = vld [vmem:[%s2 + $0x40] sm:$0xf]
      %v455 = vld [vmem:[%s2 + $0x44] sm:$0xf]
      %v456 = vld [vmem:[%s2 + $0x48] sm:$0xf]
      %v457 = vld [vmem:[%s2 + $0x4c] sm:$0xf]
      %v458 = vld [vmem:[%s2 + $0x50] sm:$0xf]
      %v459 = vld [vmem:[%s2 + $0x54] sm:$0xf]
      %v460 = vld [vmem:[%s2 + $0x58] sm:$0xf]
      %v461 = vld [vmem:[%s2 + $0x5c] sm:$0xf]
      %v462 = vld [vmem:[%s2 + $0x60] sm:$0xf]
      %v463 = vld [vmem:[%s2 + $0x64] sm:$0xf]
      %v464 = vld [vmem:[%s2 + $0x68] sm:$0xf]
      %v465 = vld [vmem:[%s2 + $0x6c] sm:$0xf]
      %v466 = vld [vmem:[%s2 + $0x70] sm:$0xf]
      %v467 = vld [vmem:[%s2 + $0x74] sm:$0xf]
      %v468 = vld [vmem:[%s2 + $0x78] sm:$0xf]
      %v469 = vld [vmem:[%s2 + $0x7c] sm:$0xf]
      %v470 = vld [vmem:[%s2 + $0x80] sm:$0xf]
      %v471 = vld [vmem:[%s2 + $0x84] sm:$0xf]
      %v472 = vld [vmem:[%s2 + $0x88] sm:$0xf]
      %v473 = vld [vmem:[%s2 + $0x8c] sm:$0xf]
      %v474 = vld [vmem:[%s2 + $0x90] sm:$0xf]
      %v475 = vld [vmem:[%s2 + $0x94] sm:$0xf]
      %v476 = vld [vmem:[%s2 + $0x98] sm:$0xf]
      %v477 = vld [vmem:[%s2 + $0x9c] sm:$0xf]
      %v478 = vld [vmem:[%s2 + $0xa0] sm:$0xf]
      %v479 = vld [vmem:[%s2 + $0xa4] sm:$0xf]
      %v480 = vld [vmem:[%s2 + $0xa8] sm:$0xf]
      %v481 = vld [vmem:[%s2 + $0xac] sm:$0xf]
      %v482 = vld [vmem:[%s2 + $0xb0] sm:$0xf]
      %v483 = vld [vmem:[%s2 + $0xb4] sm:$0xf]
      %v484 = vld [vmem:[%s2 + $0xb8] sm:$0xf]
      %v485 = vld [vmem:[%s2 + $0xbc] sm:$0xf]
      %v534 = vunpack.c.l.b16 %v438
      %v535 = vunpack.c.l.b16 %v439
      %v536 = vunpack.c.l.b16 %v440
      %v537 = vunpack.c.l.b16 %v441
      %v538 = vunpack.c.l.b16 %v442
      %v539 = vunpack.c.l.b16 %v443
      %v540 = vunpack.c.l.b16 %v444
      %v541 = vunpack.c.l.b16 %v445
      %v542 = vunpack.c.l.b16 %v446
      %v543 = vunpack.c.l.b16 %v447
      %v544 = vunpack.c.l.b16 %v448
      %v545 = vunpack.c.l.b16 %v449
      %v546 = vunpack.c.l.b16 %v450
      %v547 = vunpack.c.l.b16 %v451
      %v548 = vunpack.c.l.b16 %v452
      %v549 = vunpack.c.l.b16 %v453
      %v550 = vunpack.c.l.b16 %v454
      %v551 = vunpack.c.l.b16 %v455
      %v552 = vunpack.c.l.b16 %v456
      %v553 = vunpack.c.l.b16 %v457
      %v554 = vunpack.c.l.b16 %v458
      %v555 = vunpack.c.l.b16 %v459
      %v556 = vunpack.c.l.b16 %v460
      %v557 = vunpack.c.l.b16 %v461
      %v558 = vunpack.c.l.b16 %v462
      %v559 = vunpack.c.l.b16 %v463
      %v560 = vunpack.c.l.b16 %v464
      %v561 = vunpack.c.l.b16 %v465
      %v562 = vunpack.c.l.b16 %v466
      %v563 = vunpack.c.l.b16 %v467
      %v564 = vunpack.c.l.b16 %v468
      %v565 = vunpack.c.l.b16 %v469
      %v566 = vunpack.c.l.b16 %v470
      %v567 = vunpack.c.l.b16 %v471
      %v568 = vunpack.c.l.b16 %v472
      %v569 = vunpack.c.l.b16 %v473
      %v570 = vunpack.c.l.b16 %v474
      %v571 = vunpack.c.l.b16 %v475
      %v572 = vunpack.c.l.b16 %v476
      %v573 = vunpack.c.l.b16 %v477
      %v574 = vunpack.c.l.b16 %v478
      %v575 = vunpack.c.l.b16 %v479
      %v576 = vunpack.c.l.b16 %v480
      %v577 = vunpack.c.l.b16 %v481
      %v578 = vunpack.c.l.b16 %v482
      %v579 = vunpack.c.l.b16 %v483
      %v580 = vunpack.c.l.b16 %v484
      %v581 = vunpack.c.l.b16 %v485
      %v582 = vpack.c.b16 %v535, %v534
      %v583 = vpack.c.b16 %v537, %v536
      %v584 = vpack.c.b16 %v539, %v538
      %v585 = vpack.c.b16 %v541, %v540
      %v586 = vpack.c.b16 %v543, %v542
      %v587 = vpack.c.b16 %v545, %v544
      %v588 = vpack.c.b16 %v547, %v546
      %v589 = vpack.c.b16 %v549, %v548
      %v590 = vpack.c.b16 %v551, %v550
      %v591 = vpack.c.b16 %v553, %v552
      %v592 = vpack.c.b16 %v555, %v554
      %v593 = vpack.c.b16 %v557, %v556
      %v594 = vpack.c.b16 %v559, %v558
      %v595 = vpack.c.b16 %v561, %v560
      %v596 = vpack.c.b16 %v563, %v562
      %v597 = vpack.c.b16 %v565, %v564
      %v598 = vpack.c.b16 %v567, %v566
      %v599 = vpack.c.b16 %v569, %v568
      %v600 = vpack.c.b16 %v571, %v570
      %v601 = vpack.c.b16 %v573, %v572
      %v602 = vpack.c.b16 %v575, %v574
      %v603 = vpack.c.b16 %v577, %v576
      %v604 = vpack.c.b16 %v579, %v578
      %v605 = vpack.c.b16 %v581, %v580
      %630 = vmatpush.bf16.msra.mxu0 %v589
      %631 = vmatpush.bf16.msra.mxu0 %v588
      %632 = vmatpush.bf16.msra.mxu0 %v587
      %633 = vmatpush.bf16.msra.mxu0 %v586
      %634 = vmatpush.bf16.msra.mxu0 %v585
      %635 = vmatpush.bf16.msra.mxu0 %v584
      %636 = vmatpush.bf16.msra.mxu0 %v583
      %637 = vmatpush.bf16.msra.mxu0 %v582
      %638 = vmatmul.bf16.gmra.mxu0 %v403
      %v639 = vpop.f32.mrf.mxu0
      %v640 = vadd.f32 %v332, %v639
      %v641 = vpop.f32.mrf.mxu0
      %v642 = vadd.f32 %v333, %v641
      %643 = vmatmul.bf16.gmra.mxu0 %v397
      %v644 = vpop.f32.mrf.mxu0
      %v645 = vadd.f32 %v334, %v644
      %v646 = vpop.f32.mrf.mxu0
      %v647 = vadd.f32 %v335, %v646
      %648 = vdwg.mxu0
      %649 = vmatpush.bf16.msra.mxu0 %v597
      %650 = vmatpush.bf16.msra.mxu0 %v596
      %651 = vmatpush.bf16.msra.mxu0 %v595
      %652 = vmatpush.bf16.msra.mxu0 %v594
      %653 = vmatpush.bf16.msra.mxu0 %v593
      %654 = vmatpush.bf16.msra.mxu0 %v592
      %655 = vmatpush.bf16.msra.mxu0 %v591
      %656 = vmatpush.bf16.msra.mxu0 %v590
      %657 = vmatmul.bf16.gmra.mxu0 %v417
      %v658 = vpop.f32.mrf.mxu0
      %v659 = vadd.f32 %v640, %v658
      %v660 = vpop.f32.mrf.mxu0
      %v661 = vadd.f32 %v642, %v660
      %662 = vmatmul.bf16.gmra.mxu0 %v425
      %v663 = vpop.f32.mrf.mxu0
      %v664 = vadd.f32 %v645, %v663
      %v665 = vpop.f32.mrf.mxu0
      %v666 = vadd.f32 %v647, %v665
      %667 = vdwg.mxu0
      %668 = vmatpush.bf16.msra.mxu0 %v605
      %669 = vmatpush.bf16.msra.mxu0 %v604
      %670 = vmatpush.bf16.msra.mxu0 %v603
      %671 = vmatpush.bf16.msra.mxu0 %v602
      %672 = vmatpush.bf16.msra.mxu0 %v601
      %673 = vmatpush.bf16.msra.mxu0 %v600
      %674 = vmatpush.bf16.msra.mxu0 %v599
      %675 = vmatpush.bf16.msra.mxu0 %v598
      %676 = vmatmul.bf16.gmra.mxu0 %v433
      %v677 = vpop.f32.mrf.mxu0
      %v678 = vadd.f32 %v659, %v677
      %v679 = vpop.f32.mrf.mxu0
      %v680 = vadd.f32 %v661, %v679
      %681 = vmatmul.bf16.gmra.mxu0 %v435
      %v682 = vpop.f32.mrf.mxu0
      %v683 = vadd.f32 %v664, %v682
      %v684 = vpop.f32.mrf.mxu0
      %v685 = vadd.f32 %v666, %v684
      %686 = vdwg.mxu0
      %v687 = vld [vmem:[%s3] sm:$0x1]
      %v689 = vperm.slane %v687, 0
      %v691 = vadd.f32 %v678, %v689
      %v692 = vadd.f32 %v680, %v689
      %v693 = vadd.f32 %v683, %v689
      %v694 = vadd.f32 %v685, %v689
      %v695 = vmul.f32 %v691, 0.1
      %v696 = vmul.f32 %v692, 0.1
      %v697 = vmul.f32 %v693, 0.1
      %v698 = vmul.f32 %v694, 0.1
      %v699 = vmax.f32 %v691, %v695
      %v700 = vmax.f32 %v692, %v696
      %v701 = vmax.f32 %v693, %v697
      %v702 = vmax.f32 %v694, %v698
      %v703 = vmul.f32 %v699, %v347
      %v704 = vmul.f32 %v700, %v352
      %v705 = vmul.f32 %v701, %v357
      %v706 = vmul.f32 %v702, %v362
      %v707 = vpack.c.bf16 %v703, %v703
      %v708 = vpack.c.bf16 %v704, %v704
      %v709 = vpack.c.bf16 %v705, %v705
      %v710 = vpack.c.bf16 %v706, %v706
      %v715 = vunpack.c.l.b16 %v707
      %v716 = vunpack.c.l.b16 %v708
      %v717 = vunpack.c.l.b16 %v709
      %v718 = vunpack.c.l.b16 %v710
      %v719 = vpack.c.b16 %v716, %v715
      %v720 = vpack.c.b16 %v718, %v717
      %vm721 = vsmask.f32 1280
      %v723 = vshrl.u32 %v719, 16
      %v725 = vrot.slane %v723, 6
      %v726 = vshll.u32 %v719, 16
      %v728 = vrot.slane %v726, 7
      %v729 = vor.u32 %v725, %v728
      %v731 = vshrl.u32 %v720, 16
      %v733 = vrot.slane %v731, 6
      %v734 = vshll.u32 %v720, 16
      %v736 = vrot.slane %v734, 7
      %v737 = vor.u32 %v733, %v736
      %v738 = vsel %vm721, %v729, %v737
      %vm742 = vcmask 1041408
      %vm743 = vmand %vm742, %vm721
      %v744 = vsel %vm743, 0, %v729
      %v745 = vsel %vm743, %v737, 0
      %vm746 = vsmask.f32 6400
      %v748 = vshrl.u32 %v744, 16
      %v750 = vrot.slane %v748, 1
      %v751 = vshll.u32 %v744, 16
      %v753 = vrot.slane %v751, 2
      %v754 = vor.u32 %v750, %v753
      %v756 = vshrl.u32 %v738, 16
      %v758 = vrot.slane %v756, 1
      %v759 = vshll.u32 %v738, 16
      %v761 = vrot.slane %v759, 2
      %v762 = vor.u32 %v758, %v761
      %v763 = vsel %vm746, %v754, %v762
      %v765 = vshrl.u32 %v745, 16
      %v767 = vrot.slane %v765, 1
      %v768 = vshll.u32 %v745, 16
      %v770 = vrot.slane %v768, 2
      %v771 = vor.u32 %v767, %v770
      %v772 = vsel %vm746, %v762, %v771
      %vm777 = vcmask 1044480
      %v778 = vrot.slane %v744, 3
      %v779 = vrot.slane %v738, 3
      %v780 = vsel %vm777, %v778, %v779
      %v781 = vrot.slane %v745, 3
      %v782 = vsel %vm777, %v779, %v781
      %v785 = vld [vmem:[%s4] sm:$0xf]
      %v786 = vld [vmem:[%s4 + $0x4] sm:$0xf]
      %v787 = vld [vmem:[%s4 + $0x8] sm:$0xf]
      %v788 = vld [vmem:[%s4 + $0xc] sm:$0xf]
      %v789 = vld [vmem:[%s4 + $0x10] sm:$0xf]
      %v790 = vld [vmem:[%s4 + $0x14] sm:$0xf]
      %v791 = vld [vmem:[%s4 + $0x18] sm:$0xf]
      %v792 = vld [vmem:[%s4 + $0x1c] sm:$0xf]
      %v793 = vld [vmem:[%s4 + $0x20] sm:$0xf]
      %v794 = vld [vmem:[%s4 + $0x24] sm:$0xf]
      %v795 = vld [vmem:[%s4 + $0x28] sm:$0xf]
      %v796 = vld [vmem:[%s4 + $0x2c] sm:$0xf]
      %v797 = vld [vmem:[%s4 + $0x30] sm:$0xf]
      %v798 = vld [vmem:[%s4 + $0x34] sm:$0xf]
      %v799 = vld [vmem:[%s4 + $0x38] sm:$0xf]
      %v800 = vld [vmem:[%s4 + $0x3c] sm:$0xf]
      %v801 = vld [vmem:[%s4 + $0x40] sm:$0xf]
      %v802 = vld [vmem:[%s4 + $0x44] sm:$0xf]
      %v803 = vld [vmem:[%s4 + $0x48] sm:$0xf]
      %v804 = vld [vmem:[%s4 + $0x4c] sm:$0xf]
      %v805 = vld [vmem:[%s4 + $0x50] sm:$0xf]
      %v806 = vld [vmem:[%s4 + $0x54] sm:$0xf]
      %v807 = vld [vmem:[%s4 + $0x58] sm:$0xf]
      %v808 = vld [vmem:[%s4 + $0x5c] sm:$0xf]
      %v809 = vld [vmem:[%s4 + $0x60] sm:$0xf]
      %v810 = vld [vmem:[%s4 + $0x64] sm:$0xf]
      %v811 = vld [vmem:[%s4 + $0x68] sm:$0xf]
      %v812 = vld [vmem:[%s4 + $0x6c] sm:$0xf]
      %v813 = vld [vmem:[%s4 + $0x70] sm:$0xf]
      %v814 = vld [vmem:[%s4 + $0x74] sm:$0xf]
      %v815 = vld [vmem:[%s4 + $0x78] sm:$0xf]
      %v816 = vld [vmem:[%s4 + $0x7c] sm:$0xf]
      %v817 = vld [vmem:[%s4 + $0x80] sm:$0xf]
      %v818 = vld [vmem:[%s4 + $0x84] sm:$0xf]
      %v819 = vld [vmem:[%s4 + $0x88] sm:$0xf]
      %v820 = vld [vmem:[%s4 + $0x8c] sm:$0xf]
      %v821 = vld [vmem:[%s4 + $0x90] sm:$0xf]
      %v822 = vld [vmem:[%s4 + $0x94] sm:$0xf]
      %v823 = vld [vmem:[%s4 + $0x98] sm:$0xf]
      %v824 = vld [vmem:[%s4 + $0x9c] sm:$0xf]
      %v825 = vld [vmem:[%s4 + $0xa0] sm:$0xf]
      %v826 = vld [vmem:[%s4 + $0xa4] sm:$0xf]
      %v827 = vld [vmem:[%s4 + $0xa8] sm:$0xf]
      %v828 = vld [vmem:[%s4 + $0xac] sm:$0xf]
      %v829 = vld [vmem:[%s4 + $0xb0] sm:$0xf]
      %v830 = vld [vmem:[%s4 + $0xb4] sm:$0xf]
      %v831 = vld [vmem:[%s4 + $0xb8] sm:$0xf]
      %v832 = vld [vmem:[%s4 + $0xbc] sm:$0xf]
      %v881 = vunpack.c.l.b16 %v785
      %v882 = vunpack.c.l.b16 %v786
      %v883 = vunpack.c.l.b16 %v787
      %v884 = vunpack.c.l.b16 %v788
      %v885 = vunpack.c.l.b16 %v789
      %v886 = vunpack.c.l.b16 %v790
      %v887 = vunpack.c.l.b16 %v791
      %v888 = vunpack.c.l.b16 %v792
      %v889 = vunpack.c.l.b16 %v793
      %v890 = vunpack.c.l.b16 %v794
      %v891 = vunpack.c.l.b16 %v795
      %v892 = vunpack.c.l.b16 %v796
      %v893 = vunpack.c.l.b16 %v797
      %v894 = vunpack.c.l.b16 %v798
      %v895 = vunpack.c.l.b16 %v799
      %v896 = vunpack.c.l.b16 %v800
      %v897 = vunpack.c.l.b16 %v801
      %v898 = vunpack.c.l.b16 %v802
      %v899 = vunpack.c.l.b16 %v803
      %v900 = vunpack.c.l.b16 %v804
      %v901 = vunpack.c.l.b16 %v805
      %v902 = vunpack.c.l.b16 %v806
      %v903 = vunpack.c.l.b16 %v807
      %v904 = vunpack.c.l.b16 %v808
      %v905 = vunpack.c.l.b16 %v809
      %v906 = vunpack.c.l.b16 %v810
      %v907 = vunpack.c.l.b16 %v811
      %v908 = vunpack.c.l.b16 %v812
      %v909 = vunpack.c.l.b16 %v813
      %v910 = vunpack.c.l.b16 %v814
      %v911 = vunpack.c.l.b16 %v815
      %v912 = vunpack.c.l.b16 %v816
      %v913 = vunpack.c.l.b16 %v817
      %v914 = vunpack.c.l.b16 %v818
      %v915 = vunpack.c.l.b16 %v819
      %v916 = vunpack.c.l.b16 %v820
      %v917 = vunpack.c.l.b16 %v821
      %v918 = vunpack.c.l.b16 %v822
      %v919 = vunpack.c.l.b16 %v823
      %v920 = vunpack.c.l.b16 %v824
      %v921 = vunpack.c.l.b16 %v825
      %v922 = vunpack.c.l.b16 %v826
      %v923 = vunpack.c.l.b16 %v827
      %v924 = vunpack.c.l.b16 %v828
      %v925 = vunpack.c.l.b16 %v829
      %v926 = vunpack.c.l.b16 %v830
      %v927 = vunpack.c.l.b16 %v831
      %v928 = vunpack.c.l.b16 %v832
      %v929 = vpack.c.b16 %v882, %v881
      %v930 = vpack.c.b16 %v884, %v883
      %v931 = vpack.c.b16 %v886, %v885
      %v932 = vpack.c.b16 %v888, %v887
      %v933 = vpack.c.b16 %v890, %v889
      %v934 = vpack.c.b16 %v892, %v891
      %v935 = vpack.c.b16 %v894, %v893
      %v936 = vpack.c.b16 %v896, %v895
      %v937 = vpack.c.b16 %v898, %v897
      %v938 = vpack.c.b16 %v900, %v899
      %v939 = vpack.c.b16 %v902, %v901
      %v940 = vpack.c.b16 %v904, %v903
      %v941 = vpack.c.b16 %v906, %v905
      %v942 = vpack.c.b16 %v908, %v907
      %v943 = vpack.c.b16 %v910, %v909
      %v944 = vpack.c.b16 %v912, %v911
      %v945 = vpack.c.b16 %v914, %v913
      %v946 = vpack.c.b16 %v916, %v915
      %v947 = vpack.c.b16 %v918, %v917
      %v948 = vpack.c.b16 %v920, %v919
      %v949 = vpack.c.b16 %v922, %v921
      %v950 = vpack.c.b16 %v924, %v923
      %v951 = vpack.c.b16 %v926, %v925
      %v952 = vpack.c.b16 %v928, %v927
      %977 = vmatpush.bf16.msra.mxu0 %v936
      %978 = vmatpush.bf16.msra.mxu0 %v935
      %979 = vmatpush.bf16.msra.mxu0 %v934
      %980 = vmatpush.bf16.msra.mxu0 %v933
      %981 = vmatpush.bf16.msra.mxu0 %v932
      %982 = vmatpush.bf16.msra.mxu0 %v931
      %983 = vmatpush.bf16.msra.mxu0 %v930
      %984 = vmatpush.bf16.msra.mxu0 %v929
      %985 = vmatmul.bf16.gmra.mxu0 %v744
      %v986 = vpop.f32.mrf.mxu0
      %v987 = vpop.f32.mrf.mxu0
      %v988 = vadd.f32 %v692, %v987
      %989 = vmatmul.bf16.gmra.mxu0 %v738
      %v990 = vpop.f32.mrf.mxu0
      %v991 = vadd.f32 %v693, %v990
      %v992 = vpop.f32.mrf.mxu0
      %993 = vdwg.mxu0
      %994 = vmatpush.bf16.msra.mxu0 %v944
      %995 = vmatpush.bf16.msra.mxu0 %v943
      %996 = vmatpush.bf16.msra.mxu0 %v942
      %997 = vmatpush.bf16.msra.mxu0 %v941
      %998 = vmatpush.bf16.msra.mxu0 %v940
      %999 = vmatpush.bf16.msra.mxu0 %v939
      %1000 = vmatpush.bf16.msra.mxu0 %v938
      %1001 = vmatpush.bf16.msra.mxu0 %v937
      %1002 = vmatmul.bf16.gmra.mxu0 %v763
      %v1003 = vpop.f32.mrf.mxu0
      %v1004 = vpop.f32.mrf.mxu0
      %v1005 = vadd.f32 %v988, %v1004
      %1006 = vmatmul.bf16.gmra.mxu0 %v772
      %v1007 = vpop.f32.mrf.mxu0
      %v1008 = vadd.f32 %v991, %v1007
      %v1009 = vpop.f32.mrf.mxu0
      %1010 = vdwg.mxu0
      %1011 = vmatpush.bf16.msra.mxu0 %v952
      %1012 = vmatpush.bf16.msra.mxu0 %v951
      %1013 = vmatpush.bf16.msra.mxu0 %v950
      %1014 = vmatpush.bf16.msra.mxu0 %v949
      %1015 = vmatpush.bf16.msra.mxu0 %v948
      %1016 = vmatpush.bf16.msra.mxu0 %v947
      %1017 = vmatpush.bf16.msra.mxu0 %v946
      %1018 = vmatpush.bf16.msra.mxu0 %v945
      %1019 = vmatmul.bf16.gmra.mxu0 %v780
      %v1020 = vpop.f32.mrf.mxu0
      %v1021 = vpop.f32.mrf.mxu0
      %v1022 = vadd.f32 %v1005, %v1021
      %1023 = vmatmul.bf16.gmra.mxu0 %v782
      %v1024 = vpop.f32.mrf.mxu0
      %v1025 = vadd.f32 %v1008, %v1024
      %v1026 = vpop.f32.mrf.mxu0
      %1027 = vdwg.mxu0
      %v1028 = vld [vmem:[%s5] sm:$0x1]
      %v1030 = vperm.slane %v1028, 0
      %v1032 = vadd.f32 %v1022, %v1030
      %v1033 = vadd.f32 %v1025, %v1030
      %v1034 = vmul.f32 %v1032, %v352
      %v1035 = vmul.f32 %v1033, %v357
      %1036 = vst [vmem:[%s321] sm:$0xff] %v1034
      %1037 = vst [vmem:[%s321 + $0x8] sm:$0xff] %v1035
      %s1038 = smul.u32 2, %s22
      %p1039 = scmp.lt.s32.totalorder %s21, 1
      %s1040 = scalar_select %p1039, %s21, 1
      %p1041 = scmp.lt.s32.totalorder %s1038, 5
      %s1042 = scalar_select %p1041, %s1038, 5
      %s1043 = smul.addr %s1040, 6
      %s1044 = sadd.s32 %s1042, %s1043
      %s1045 = smul.addr %s1044, 8
      %s1046 = scalar_lea.vmem %s6, %s1045
      // Predicated region
      $region45: #{resblock2_forward.1} parent=43 // pred_check
        %p1047 = pneg %p189
      $region46: #{resblock2_forward.1} parent=43 // pred_check_branch
        %1049 = sbr.rel (%p1047) target = $region48
      $region47: #{resblock2_forward.1} parent=43 // pred_region
        %s1050 = smul.u32 2, %s22
      $region48: #{resblock2_forward.1} parent=43 // pred_fallthru
        _
    $region44: #{resblock2_forward.1} parent=5 // pred_fallthru
      _
    %p1051 = scmp.le.s32.totalorder 2, %s12
    // Predicated region
    $region49: #{resblock2_forward.1} parent=5 // pred_check
      %p1052 = pneg %p1051
    $region50: #{resblock2_forward.1} parent=5 // pred_check_branch
      %1054 = sbr.rel (%p1052) target = $region52
    $region51: #{resblock2_forward.1} parent=5 // pred_region
      %s1055 = ssub.s32 %s12, 2
      // Predicated region
      $region53: #{resblock2_forward.1} parent=51 // pred_check
        %p1056 = pneg %p195
      $region54: #{resblock2_forward.1} parent=51 // pred_check_branch
        %1058 = sbr.rel (%p1056) target = $region56
      $region55: #{resblock2_forward.1} parent=51 // pred_region
        %s1059 = smul.u32 2, %s24
        %p1060 = scmp.lt.s32.totalorder %s23, 1
        %s1061 = scalar_select %p1060, %s23, 1
        %p1062 = scmp.lt.s32.totalorder %s1059, 5
        %s1063 = scalar_select %p1062, %s1059, 5
        %s1064 = smul.addr %s1061, 6
        %s1065 = sadd.s32 %s1063, %s1064
        %s1066 = smul.addr %s1065, 8
        %s1067 = scalar_lea.vmem %s6, %s1066
      $region56: #{resblock2_forward.1} parent=51 // pred_fallthru
        _
    $region52: #{resblock2_forward.1} parent=5 // pred_fallthru
      _
  $region6: #{resblock2_forward.1} parent=0 // loop_footer
    %s16 = sadd.s32 1, %s12
  $region7: #{resblock2_forward.1} parent=0 // loop_footer_branch
    %11 = sbr.rel target = $region3
  $region8: #{resblock2_forward.1} parent=0 // loop_exit
    _

</llo_original>
